<compile_context>
chip_gen: v6e
topology: v6e:2x2x1
jax: 0.10.0
libtpu: 0.0.40
codegen_flags: <defaults>
</compile_context>

<pallas_src>
import math

import jax
import jax.numpy as jnp
from jax.experimental import pallas as pl
from jax.experimental.pallas import tpu as pltpu

KH = KW = 3
STRIDE = 2

LANE = 128     # vreg lane width
SUBLANE = 8    # vreg sublane count


def _round_up(x, m):
    return (x + m - 1) // m * m


# ---------------------------------------------------------------------------
# Pallas kernel: lane-dense MXU matmul.  Bias is pre-folded into the operands
# (ones column appended to A, bias row appended to W), so the kernel is a pure
# dot: o = a @ w.  Whole problem is one VMEM-resident block (<0.5 MiB).
#   a_ref: (M_pad, K_pad)        im2col patches (+ ones column)
#   w_ref: (K_pad, COUT_PAD)     weights (+ bias row), Cout zero-padded to 128
#   o_ref: (M_pad, COUT_PAD)
# ---------------------------------------------------------------------------
def _matmul_kernel(a_ref, w_ref, o_ref):
    o_ref[...] = jnp.dot(
        a_ref[...], w_ref[...], preferred_element_type=jnp.float32
    ).astype(o_ref.dtype)


def _conv_matmul_pallas(a_pad, w_pad):
    m_pad, k_pad = a_pad.shape
    _, cout_pad = w_pad.shape
    assert m_pad % SUBLANE == 0
    assert k_pad % LANE == 0 and cout_pad % LANE == 0
    return pl.pallas_call(
        _matmul_kernel,
        out_shape=jax.ShapeDtypeStruct((m_pad, cout_pad), a_pad.dtype),
        grid=(1,),  # single step: whole problem fits VMEM on every generation
        in_specs=[
            pl.BlockSpec((m_pad, k_pad), lambda i: (0, 0)),
            pl.BlockSpec((k_pad, cout_pad), lambda i: (0, 0)),
        ],
        out_specs=pl.BlockSpec((m_pad, cout_pad), lambda i: (0, 0)),
    )(a_pad, w_pad)


# ---------------------------------------------------------------------------
# One-time weight preparation (hoisted out of the per-call path).
# (Cout, Cin, KH, KW) -> (KH, KW, Cin, Cout) -> (K, Cout), zero-pad to
# (k_pad, cout_pad), and place the bias as row `k` so the matmul adds it.
# ---------------------------------------------------------------------------
def prepare_conv_weights(w_oihw, bias):
    cout, cin, kh, kw = w_oihw.shape
    k = kh * kw * cin
    k_pad = _round_up(k + 1, LANE)          # 144 + 1 bias column -> 256
    cout_pad = _round_up(cout, LANE)        # 32 -> 128 (lane-dense output)
    w_mat = jnp.transpose(w_oihw, (2, 3, 1, 0)).reshape(k, cout)
    w_with_bias = jnp.concatenate([w_mat, bias.reshape(1, cout)], axis=0)
    wp = jnp.pad(w_with_bias, ((0, k_pad - (k + 1)), (0, cout_pad - cout)))
    return wp, k, cout


# ---------------------------------------------------------------------------
# Conv2d(16, 32, 3, stride=2) built on the Pallas matmul kernel (NHWC inside).
# ---------------------------------------------------------------------------
def _im2col_nhwc(x_nhwc):
    """Extract stride-2 3x3 patches.  Feature order is (kh, kw, cin)."""
    n, h, w, c = x_nhwc.shape
    ho = (h - KH) // STRIDE + 1
    wo = (w - KW) // STRIDE + 1
    cols = []
    for i in range(KH):
        for j in range(KW):
            patch = jax.lax.slice(
                x_nhwc,
                (0, i, j, 0),
                (n, i + STRIDE * (ho - 1) + 1, j + STRIDE * (wo - 1) + 1, c),
                (1, STRIDE, STRIDE, 1),
            )  # (n, ho, wo, c)
            cols.append(patch)
    return jnp.concatenate(cols, axis=-1), ho, wo  # (n, ho, wo, KH*KW*c)


def conv2d_pallas_nhwc(x_nhwc, w_padded, k, cout):
    n, h, w, cin = x_nhwc.shape
    patches, ho, wo = _im2col_nhwc(x_nhwc)
    m = n * ho * wo
    assert k == KH * KW * cin
    patches_2d = patches.reshape(m, k)

    k_pad, cout_pad = w_padded.shape
    m_pad = _round_up(max(m, SUBLANE), LANE)   # 98 -> 128

    # A: append the all-ones bias column, then one jnp.pad to (m_pad, k_pad).
    ones_col = jnp.ones((m, 1), patches_2d.dtype)
    a = jnp.concatenate([patches_2d, ones_col], axis=1)        # (m, k+1)
    a = jnp.pad(a, ((0, m_pad - m), (0, k_pad - (k + 1))))     # (m_pad, k_pad)

    out_pad = _conv_matmul_pallas(a, w_padded)                 # (m_pad, cout_pad)
    return out_pad[:m, :cout].reshape(n, ho, wo, cout)         # (n, ho, wo, cout)


def conv2d_pallas_nchw(x_nchw, w_padded, k, cout):
    """PyTorch-boundary wrapper: NCHW in, NCHW out."""
    x_nhwc = jnp.transpose(x_nchw, (0, 2, 3, 1))
    out_nhwc = conv2d_pallas_nhwc(x_nhwc, w_padded, k, cout)
    return jnp.transpose(out_nhwc, (0, 3, 1, 2))


# ---------------------------------------------------------------------------
# ExampleModule equivalent
# ---------------------------------------------------------------------------
class ExampleModule:
    def __init__(self, key, *, compute_discarded=False):
        k1, k2, k3, k4 = jax.random.split(key, 4)
        # Conv2d(16, 32, 3, stride=2): weight (32, 16, 3, 3), bias (32,)
        fan_in_conv = 16 * KH * KW
        bc = 1.0 / math.sqrt(fan_in_conv)
        self.conv_w = jax.random.uniform(k1, (32, 16, 3, 3), jnp.float32, -bc, bc)
        self.conv_b = jax.random.uniform(k2, (32,), jnp.float32, -bc, bc)
        # Padded/bias-folded weight matrix, prepared once (hoisted from the
        # per-call path per perf review).
        self.conv_wp, self.conv_k, self.conv_cout = prepare_conv_weights(
            self.conv_w, self.conv_b)
        # Linear(123, 456): weight (456, 123), bias (456,)  (never usable on x)
        bl = 1.0 / math.sqrt(123)
        self.lin_w = jax.random.uniform(k3, (456, 123), jnp.float32, -bl, bl)
        self.lin_b = jax.random.uniform(k4, (456,), jnp.float32, -bl, bl)
        # If True, actually run the discarded my_conv2d(x) (faithful-but-wasteful).
        self.compute_discarded = compute_discarded

    def forward(self, x):
        # Hot path: the conv result is discarded and forward returns x, so the
        # default path is a pure identity -- no kernel launch, no transposes.
        if self.compute_discarded:
            conv2d_pallas_nchw(x, self.conv_wp, self.conv_k, self.conv_cout)

        # TODO(synk): self.my_linear(x) needs last dim 123 (x has 16) -> raises
        # in PyTorch; F.linear(x, x, True) and F.conv2d(x, x, 1) pass non-tensor
        # biases -> raise in PyTorch.  Results would be discarded; not computed.
        return x


if __name__ == "__main__":
    key = jax.random.PRNGKey(0)
    k_param, k_x = jax.random.split(key)

    module = ExampleModule(k_param)

    # x: NCHW, channels=16 to match Conv2d(16, 32, 3, stride=2).
    x = jax.random.normal(k_x, (2, 16, 16, 16), dtype=jnp.float32)

    # Run the Pallas conv kernel once and validate against XLA's reference conv.
    conv_fn = jax.jit(conv2d_pallas_nchw, static_argnums=(2, 3))
    pallas_conv = conv_fn(x, module.conv_wp, module.conv_k, module.conv_cout)
    jax.block_until_ready(pallas_conv)
    ref_conv = jax.lax.conv_general_dilated(
        x, module.conv_w, window_strides=(STRIDE, STRIDE), padding="VALID",
        dimension_numbers=("NCHW", "OIHW", "NCHW"),
    ) + module.conv_b.reshape(1, -1, 1, 1)
    assert pallas_conv.shape == (2, 32, 7, 7)
    assert bool(jnp.allclose(pallas_conv, ref_conv, atol=1e-4, rtol=1e-4))

    # Module forward: identity hot path (discarded ops elided).
    out = jax.block_until_ready(module.forward(x))
    assert out.shape == x.shape and bool(jnp.array_equal(out, x))
    print("KERNEL_OK")
</pallas_src>

<mosaic_0001>
module attributes {stable_mosaic.version = 11 : i64} {
  func.func @_matmul_kernel(%arg0: i32, %arg1: memref<128x256xf32, #tpu.memory_space<vmem>>, %arg2: memref<256x128xf32, #tpu.memory_space<vmem>>, %arg3: memref<128x128xf32, #tpu.memory_space<vmem>>) attributes {dimension_semantics = [#tpu.dimension_semantics<arbitrary>], iteration_bounds = array<i64: 1>, scalar_prefetch = 0 : i64, scratch_operands = 0 : i64, tpu.core_type = #tpu.core_type<tc>, window_params = [{pipeline_mode = #tpu.pipeline_mode<synchronous>, transform_indices = @transform_0, window_bounds = array<i64: 128, 256>}, {pipeline_mode = #tpu.pipeline_mode<synchronous>, transform_indices = @transform_1, window_bounds = array<i64: 256, 128>}, {pipeline_mode = #tpu.pipeline_mode<synchronous>, transform_indices = @transform_2, window_bounds = array<i64: 128, 128>}]} {
    %c0 = arith.constant 0 : index
    %c0_0 = arith.constant 0 : index
    %0 = vector.load %arg1[%c0, %c0_0] : memref<128x256xf32, #tpu.memory_space<vmem>>, vector<128x256xf32>
    %c0_1 = arith.constant 0 : index
    %c0_2 = arith.constant 0 : index
    %1 = vector.load %arg2[%c0_1, %c0_2] : memref<256x128xf32, #tpu.memory_space<vmem>>, vector<256x128xf32>
    %cst = arith.constant dense<0.000000e+00> : vector<128x128xf32>
    %2 = tpu.matmul %0, %1, %cst {dimension_numbers = #tpu.dot_dimension_numbers<[1], [0], [0], [1], [0, 0, 1, 1], [], []>} : vector<128x256xf32>, vector<256x128xf32>, vector<128x128xf32> -> vector<128x128xf32>
    %c0_3 = arith.constant 0 : index
    %c0_4 = arith.constant 0 : index
    %3 = vector.load %arg3[%c0_3, %c0_4] : memref<128x128xf32, #tpu.memory_space<vmem>>, vector<128x128xf32>
    tpu.vector_store %arg3[%c0_3, %c0_4], %2 {strides = array<i32>} : memref<128x128xf32, #tpu.memory_space<vmem>>, vector<128x128xf32>,
    return
  }
  func.func @transform_0(%arg0: i32) -> (i32, i32) {
    %c0_i32 = arith.constant 0 : i32
    %c0_i32_0 = arith.constant 0 : i32
    %c0_i32_1 = arith.constant 0 : i32
    return %c0_i32, %c0_i32_0 : i32, i32
  }
  func.func @transform_1(%arg0: i32) -> (i32, i32) {
    %c0_i32 = arith.constant 0 : i32
    %c0_i32_0 = arith.constant 0 : i32
    %c0_i32_1 = arith.constant 0 : i32
    return %c0_i32, %c0_i32_0 : i32, i32
  }
  func.func @transform_2(%arg0: i32) -> (i32, i32) {
    %c0_i32 = arith.constant 0 : i32
    %c0_i32_0 = arith.constant 0 : i32
    %c0_i32_1 = arith.constant 0 : i32
    return %c0_i32, %c0_i32_0 : i32, i32
  }
}

</mosaic_0001>

<llo_original>
// kernel: conv2d_pallas_nchw.1
$region0: #{conv2d_pallas_nchw.1}
  #allocation0 [shape = 'u32[]', space=smem, size = 0x4, offset = 0x4, fixed_abs, tag = 'smem constant byte address 0x4 - core index']
  #allocation1 [shape = 'u32[144,128]{1,0:T(1,128)}', space=vmem, size = 0x12000, scoped, tag = 'internal scratch']
  %s0 = inlined_call_operand.vmem [shape: f32[128,256], index: 0, kind: input, shape index: {}]
  %s1 = inlined_call_operand.vmem [shape: f32[256,128], index: 1, kind: input, shape index: {}]
  %s2 = inlined_call_operand.vmem [shape: f32[128,128], index: 2, kind: output, shape index: {}]
  %s3 = sld [smem:[#allocation0]]
  $region18: #{conv2d_pallas_nchw.1} parent=0
    _
  %s5 = ssub.s32 1, %s3
  %s6 = scalar_select 0, %s5, %s3
  // Predicated region
  $region2: #{conv2d_pallas_nchw.1} parent=0 // pred_check
    _
  $region3: #{conv2d_pallas_nchw.1} parent=0 // pred_check_branch
    %8 = sbr.rel (0) target = $region5
  $region4: #{conv2d_pallas_nchw.1} parent=0 // pred_region
    _
  $region5: #{conv2d_pallas_nchw.1} parent=0 // pred_fallthru
    _
  // Predicated region
  $region6: #{conv2d_pallas_nchw.1} parent=0 // pred_check
    _
  $region7: #{conv2d_pallas_nchw.1} parent=0 // pred_check_branch
    %10 = sbr.rel (0) target = $region9
  $region8: #{conv2d_pallas_nchw.1} parent=0 // pred_region
    _
  $region9: #{conv2d_pallas_nchw.1} parent=0 // pred_fallthru
    _
  %v11 = vld [vmem:[%s0] sm:$0xff]
  %v12 = vld [vmem:[%s0 + $0x8] sm:$0xff]
  %v13 = vld [vmem:[%s0 + $0x10] sm:$0xff]
  %v14 = vld [vmem:[%s0 + $0x18] sm:$0xff]
  %v15 = vld [vmem:[%s0 + $0x20] sm:$0xff]
  %v16 = vld [vmem:[%s0 + $0x28] sm:$0xff]
  %v17 = vld [vmem:[%s0 + $0x30] sm:$0xff]
  %v18 = vld [vmem:[%s0 + $0x38] sm:$0xff]
  %v19 = vld [vmem:[%s0 + $0x40] sm:$0xff]
  %v20 = vld [vmem:[%s0 + $0x48] sm:$0xff]
  %v21 = vld [vmem:[%s0 + $0x50] sm:$0xff]
  %v22 = vld [vmem:[%s0 + $0x58] sm:$0xff]
  %v23 = vld [vmem:[%s0 + $0x60] sm:$0xff]
  %v24 = vld [vmem:[%s0 + $0x68] sm:$0xff]
  %v25 = vld [vmem:[%s0 + $0x70] sm:$0xff]
  %v26 = vld [vmem:[%s0 + $0x78] sm:$0xff]
  %v27 = vld [vmem:[%s0 + $0x80] sm:$0xff]
  %v28 = vld [vmem:[%s0 + $0x88] sm:$0xff]
  %v29 = vld [vmem:[%s0 + $0x90] sm:$0xff]
  %v30 = vld [vmem:[%s0 + $0x98] sm:$0xff]
  %v31 = vld [vmem:[%s0 + $0xa0] sm:$0xff]
  %v32 = vld [vmem:[%s0 + $0xa8] sm:$0xff]
  %v33 = vld [vmem:[%s0 + $0xb0] sm:$0xff]
  %v34 = vld [vmem:[%s0 + $0xb8] sm:$0xff]
  %v35 = vld [vmem:[%s0 + $0xc0] sm:$0xff]
  %v36 = vld [vmem:[%s0 + $0xc8] sm:$0xff]
  %v37 = vld [vmem:[%s0 + $0xd0] sm:$0xff]
  %v38 = vld [vmem:[%s0 + $0xd8] sm:$0xff]
  %v39 = vld [vmem:[%s0 + $0xe0] sm:$0xff]
  %v40 = vld [vmem:[%s0 + $0xe8] sm:$0xff]
  %v41 = vld [vmem:[%s0 + $0xf0] sm:$0xff]
  %v42 = vld [vmem:[%s0 + $0xf8] sm:$0xff]
  %v43 = vld [vmem:[%s1] sm:$0xff]
  %v44 = vld [vmem:[%s1 + $0x8] sm:$0xff]
  %v45 = vld [vmem:[%s1 + $0x10] sm:$0xff]
  %v46 = vld [vmem:[%s1 + $0x18] sm:$0xff]
  %v47 = vld [vmem:[%s1 + $0x20] sm:$0xff]
  %v48 = vld [vmem:[%s1 + $0x28] sm:$0xff]
  %v49 = vld [vmem:[%s1 + $0x30] sm:$0xff]
  %v50 = vld [vmem:[%s1 + $0x38] sm:$0xff]
  %v51 = vld [vmem:[%s1 + $0x40] sm:$0xff]
  %v52 = vld [vmem:[%s1 + $0x48] sm:$0xff]
  %v53 = vld [vmem:[%s1 + $0x50] sm:$0xff]
  %v54 = vld [vmem:[%s1 + $0x58] sm:$0xff]
  %v55 = vld [vmem:[%s1 + $0x60] sm:$0xff]
  %v56 = vld [vmem:[%s1 + $0x68] sm:$0xff]
  %v57 = vld [vmem:[%s1 + $0x70] sm:$0xff]
  %v58 = vld [vmem:[%s1 + $0x78] sm:$0xff]
  %v59 = vld [vmem:[%s1 + $0x80] sm:$0xff]
  %v60 = vld [vmem:[%s1 + $0x88] sm:$0xff]
  %v61 = vld [vmem:[%s1 + $0x90] sm:$0xff]
  %v62 = vld [vmem:[%s1 + $0x98] sm:$0xff]
  %v63 = vld [vmem:[%s1 + $0xa0] sm:$0xff]
  %v64 = vld [vmem:[%s1 + $0xa8] sm:$0xff]
  %v65 = vld [vmem:[%s1 + $0xb0] sm:$0xff]
  %v66 = vld [vmem:[%s1 + $0xb8] sm:$0xff]
  %v67 = vld [vmem:[%s1 + $0xc0] sm:$0xff]
  %v68 = vld [vmem:[%s1 + $0xc8] sm:$0xff]
  %v69 = vld [vmem:[%s1 + $0xd0] sm:$0xff]
  %v70 = vld [vmem:[%s1 + $0xd8] sm:$0xff]
  %v71 = vld [vmem:[%s1 + $0xe0] sm:$0xff]
  %v72 = vld [vmem:[%s1 + $0xe8] sm:$0xff]
  %v73 = vld [vmem:[%s1 + $0xf0] sm:$0xff]
  %v74 = vld [vmem:[%s1 + $0xf8] sm:$0xff]
  %75 = vmatprep.subr.mxu0 0.0
  %76 = vmatpush1.msra.mxu0 %v58
  %77 = vmatprep.subr.mxu0 0.0
  %78 = vmatpush1.msra.mxu0 %v57
  %79 = vmatprep.subr.mxu0 0.0
  %80 = vmatpush1.msra.mxu0 %v56
  %81 = vmatprep.subr.mxu0 0.0
  %82 = vmatpush1.msra.mxu0 %v55
  %83 = vmatprep.subr.mxu0 0.0
  %84 = vmatpush1.msra.mxu0 %v54
  %85 = vmatprep.subr.mxu0 0.0
  %86 = vmatpush1.msra.mxu0 %v53
  %87 = vmatprep.subr.mxu0 0.0
  %88 = vmatpush1.msra.mxu0 %v52
  %89 = vmatprep.subr.mxu0 0.0
  %90 = vmatpush1.msra.mxu0 %v51
  %91 = vmatprep.subr.mxu0 0.0
  %92 = vmatpush1.msra.mxu0 %v50
  %93 = vmatprep.subr.mxu0 0.0
  %94 = vmatpush1.msra.mxu0 %v49
  %95 = vmatprep.subr.mxu0 0.0
  %96 = vmatpush1.msra.mxu0 %v48
  %97 = vmatprep.subr.mxu0 0.0
  %98 = vmatpush1.msra.mxu0 %v47
  %99 = vmatprep.subr.mxu0 0.0
  %100 = vmatpush1.msra.mxu0 %v46
  %101 = vmatprep.subr.mxu0 0.0
  %102 = vmatpush1.msra.mxu0 %v45
  %103 = vmatprep.subr.mxu0 0.0
  %104 = vmatpush1.msra.mxu0 %v44
  %105 = vmatprep.subr.mxu0 0.0
  %106 = vmatpush1.msra.mxu0 %v43
  %107 = vmatprep.subr.mxu0 0.0
  %108 = vmatpush2.msra.mxu0 %v74
  %109 = vmatprep.subr.mxu0 0.0
  %110 = vmatpush2.msra.mxu0 %v73
  %111 = vmatprep.subr.mxu0 0.0
  %112 = vmatpush2.msra.mxu0 %v72
  %113 = vmatprep.subr.mxu0 0.0
  %114 = vmatpush2.msra.mxu0 %v71
  %115 = vmatprep.subr.mxu0 0.0
  %116 = vmatpush2.msra.mxu0 %v70
  %117 = vmatprep.subr.mxu0 0.0
  %118 = vmatpush2.msra.mxu0 %v69
  %119 = vmatprep.subr.mxu0 0.0
  %120 = vmatpush2.msra.mxu0 %v68
  %121 = vmatprep.subr.mxu0 0.0
  %122 = vmatpush2.msra.mxu0 %v67
  %123 = vmatprep.subr.mxu0 0.0
  %124 = vmatpush2.msra.mxu0 %v66
  %125 = vmatprep.subr.mxu0 0.0
  %126 = vmatpush2.msra.mxu0 %v65
  %127 = vmatprep.subr.mxu0 0.0
  %128 = vmatpush2.msra.mxu0 %v64
  %129 = vmatprep.subr.mxu0 0.0
  %130 = vmatpush2.msra.mxu0 %v63
  %131 = vmatprep.subr.mxu0 0.0
  %132 = vmatpush2.msra.mxu0 %v62
  %133 = vmatprep.subr.mxu0 0.0
  %134 = vmatpush2.msra.mxu0 %v61
  %135 = vmatprep.subr.mxu0 0.0
  %136 = vmatpush2.msra.mxu0 %v60
  %137 = vmatprep.subr.mxu0 0.0
  %138 = vmatpush2.msra.mxu0 %v59
  %139 = vmatprep.mubr.f32.mxu0 %v12
  %140 = vmatmul.mubr.f32.gmra.mxu0 %v11
  %v141 = vpop.f32.mrf.mxu0
  %v142 = vadd.f32 0.0, %v141
  %v143 = vpop.f32.mrf.mxu0
  %144 = vmatprep.mubr.f32.mxu0 %v14
  %145 = vmatmul.mubr.f32.gmra.mxu0 %v13
  %v146 = vpop.f32.mrf.mxu0
  %v147 = vadd.f32 0.0, %v146
  %v148 = vpop.f32.mrf.mxu0
  %149 = vmatprep.mubr.f32.mxu0 %v16
  %150 = vmatmul.mubr.f32.gmra.mxu0 %v15
  %v151 = vpop.f32.mrf.mxu0
  %v152 = vadd.f32 0.0, %v151
  %v153 = vpop.f32.mrf.mxu0
  %154 = vmatprep.mubr.f32.mxu0 %v18
  %155 = vmatmul.mubr.f32.gmra.mxu0 %v17
  %v156 = vpop.f32.mrf.mxu0
  %v157 = vadd.f32 0.0, %v156
  %v158 = vpop.f32.mrf.mxu0
  %159 = vmatprep.mubr.f32.mxu0 %v20
  %160 = vmatmul.mubr.f32.gmra.mxu0 %v19
  %v161 = vpop.f32.mrf.mxu0
  %v162 = vadd.f32 0.0, %v161
  %v163 = vpop.f32.mrf.mxu0
  %164 = vmatprep.mubr.f32.mxu0 %v22
  %165 = vmatmul.mubr.f32.gmra.mxu0 %v21
  %v166 = vpop.f32.mrf.mxu0
  %v167 = vadd.f32 0.0, %v166
  %v168 = vpop.f32.mrf.mxu0
  %169 = vmatprep.mubr.f32.mxu0 %v24
  %170 = vmatmul.mubr.f32.gmra.mxu0 %v23
  %v171 = vpop.f32.mrf.mxu0
  %v172 = vadd.f32 0.0, %v171
  %v173 = vpop.f32.mrf.mxu0
  %174 = vmatprep.mubr.f32.mxu0 %v26
  %175 = vmatmul.mubr.f32.gmra.mxu0 %v25
  %v176 = vpop.f32.mrf.mxu0
  %v177 = vadd.f32 0.0, %v176
  %v178 = vpop.f32.mrf.mxu0
  %179 = vmatprep.mubr.f32.mxu0 %v28
  %180 = vmatmul.mubr.f32.gmra.mxu0 %v27
  %v181 = vpop.f32.mrf.mxu0
  %v182 = vadd.f32 0.0, %v181
  %v183 = vpop.f32.mrf.mxu0
  %184 = vmatprep.mubr.f32.mxu0 %v30
  %185 = vmatmul.mubr.f32.gmra.mxu0 %v29
  %v186 = vpop.f32.mrf.mxu0
  %v187 = vadd.f32 0.0, %v186
  %v188 = vpop.f32.mrf.mxu0
  %189 = vmatprep.mubr.f32.mxu0 %v32
  %190 = vmatmul.mubr.f32.gmra.mxu0 %v31
  %v191 = vpop.f32.mrf.mxu0
  %v192 = vadd.f32 0.0, %v191
  %v193 = vpop.f32.mrf.mxu0
  %194 = vmatprep.mubr.f32.mxu0 %v34
  %195 = vmatmul.mubr.f32.gmra.mxu0 %v33
  %v196 = vpop.f32.mrf.mxu0
  %v197 = vadd.f32 0.0, %v196
  %v198 = vpop.f32.mrf.mxu0
  %199 = vmatprep.mubr.f32.mxu0 %v36
  %200 = vmatmul.mubr.f32.gmra.mxu0 %v35
  %v201 = vpop.f32.mrf.mxu0
  %v202 = vadd.f32 0.0, %v201
  %v203 = vpop.f32.mrf.mxu0
  %204 = vmatprep.mubr.f32.mxu0 %v38
  %205 = vmatmul.mubr.f32.gmra.mxu0 %v37
  %v206 = vpop.f32.mrf.mxu0
  %v207 = vadd.f32 0.0, %v206
  %v208 = vpop.f32.mrf.mxu0
  %209 = vmatprep.mubr.f32.mxu0 %v40
  %210 = vmatmul.mubr.f32.gmra.mxu0 %v39
  %v211 = vpop.f32.mrf.mxu0
  %v212 = vadd.f32 0.0, %v211
  %v213 = vpop.f32.mrf.mxu0
  %214 = vmatprep.mubr.f32.mxu0 %v42
  %215 = vmatmul.mubr.f32.gmra.mxu0 %v41
  %v216 = vpop.f32.mrf.mxu0
  %v217 = vadd.f32 0.0, %v216
  %v218 = vpop.f32.mrf.mxu0
  %219 = vdwg.mxu0
  %220 = vst [vmem:[%s2] sm:$0xff] %v142
  %221 = vst [vmem:[%s2 + $0x8] sm:$0xff] %v147
  %222 = vst [vmem:[%s2 + $0x10] sm:$0xff] %v152
  %223 = vst [vmem:[%s2 + $0x18] sm:$0xff] %v157
  %224 = vst [vmem:[%s2 + $0x20] sm:$0xff] %v162
  %225 = vst [vmem:[%s2 + $0x28] sm:$0xff] %v167
  %226 = vst [vmem:[%s2 + $0x30] sm:$0xff] %v172
  %227 = vst [vmem:[%s2 + $0x38] sm:$0xff] %v177
  %228 = vst [vmem:[%s2 + $0x40] sm:$0xff] %v182
  %229 = vst [vmem:[%s2 + $0x48] sm:$0xff] %v187
  %230 = vst [vmem:[%s2 + $0x50] sm:$0xff] %v192
  %231 = vst [vmem:[%s2 + $0x58] sm:$0xff] %v197
  %232 = vst [vmem:[%s2 + $0x60] sm:$0xff] %v202
  %233 = vst [vmem:[%s2 + $0x68] sm:$0xff] %v207
  %234 = vst [vmem:[%s2 + $0x70] sm:$0xff] %v212
  %235 = vst [vmem:[%s2 + $0x78] sm:$0xff] %v217
  // Predicated region
  $region10: #{conv2d_pallas_nchw.1} parent=0 // pred_check
    _
  $region11: #{conv2d_pallas_nchw.1} parent=0 // pred_check_branch
    %237 = sbr.rel (0) target = $region13
  $region12: #{conv2d_pallas_nchw.1} parent=0 // pred_region
    _
  $region13: #{conv2d_pallas_nchw.1} parent=0 // pred_fallthru
    _
  // Predicated region
  $region14: #{conv2d_pallas_nchw.1} parent=0 // pred_check
    _
  $region15: #{conv2d_pallas_nchw.1} parent=0 // pred_check_branch
    %239 = sbr.rel (0) target = $region17
  $region16: #{conv2d_pallas_nchw.1} parent=0 // pred_region
    _
  $region17: #{conv2d_pallas_nchw.1} parent=0 // pred_fallthru
    _

</llo_original>
